<compile_context>
chip_gen: v7x
topology: tpu7x:2x2x1
jax: 0.10.0
libtpu: 0.0.40
codegen_flags: <defaults>
</compile_context>

<pallas_src>
import jax
import jax.numpy as jnp
from jax.experimental import pallas as pl
from jax.experimental.pallas import tpu as pltpu

_LANE = 128
_SUBLANE = 8
_MAX_BLOCK_BYTES = 1 << 20   # ~1 MiB per (block_rows, cols) buffer


def _swish_kernel(beta_ref, x_ref, o_ref):
    # beta_ref: SMEM (1,) scalar (scalar-prefetch arg)
    # x_ref / o_ref: (block_rows, cols) VMEM tiles
    x = x_ref[...]
    beta = beta_ref[0].astype(x.dtype)          # keep native dtype end-to-end
    o_ref[...] = x * jax.nn.sigmoid(beta * x)   # sigmoid -> EUP, muls -> VPU


def _pick_block_rows(rows, cols, itemsize):
    """Largest multiple-of-8 divisor of `rows` under the VMEM / megacore caps."""
    max_rows_by_vmem = max(
        _SUBLANE,
        (_MAX_BLOCK_BYTES // (cols * itemsize)) // _SUBLANE * _SUBLANE)
    # prefer >= 2 grid steps when the data allows it (feeds both v7x TCs)
    target = min(512, max_rows_by_vmem, max(_SUBLANE, rows // 2))
    target = max(_SUBLANE, target // _SUBLANE * _SUBLANE)
    br = target
    while br > _SUBLANE and rows % br != 0:
        br -= _SUBLANE
    return br


def _choose_layout(n, itemsize):
    """Return (rows, cols, block_rows, needs_pad) for a lane-dense slab."""
    # Aligned fast path: no padding, pure reshape in the wrapper.
    aligned = [c for c in (512, 256, 128) if n % (c * _SUBLANE) == 0]
    if aligned:
        # prefer a cols that leaves >= 2 row-blocks for megacore sharding
        cols = next((c for c in aligned if n // c >= 2 * _SUBLANE), aligned[-1])
        rows = n // cols
        return rows, cols, _pick_block_rows(rows, cols, itemsize), False

    # Ragged path: zero-pad to a full (rows, cols) slab (swish(0) == 0).
    cols = 512
    while cols > _LANE and n < 2 * _SUBLANE * cols:
        cols //= 2                              # 512 -> 256 -> 128, lane-dense
    rows_total = -(-n // cols)                  # ceil
    max_rows_by_vmem = max(
        _SUBLANE,
        (_MAX_BLOCK_BYTES // (cols * itemsize)) // _SUBLANE * _SUBLANE)
    half_rows = (((rows_total + 1) // 2) + _SUBLANE - 1) // _SUBLANE * _SUBLANE
    block_rows = max(_SUBLANE, min(512, max_rows_by_vmem, half_rows))
    rows_padded = -(-rows_total // block_rows) * block_rows
    return rows_padded, cols, block_rows, True


def swish(x, beta):
    """Swish forward. x: any-shape array; beta: shape-(1,) learnable scalar."""
    orig_shape = x.shape
    n = x.size
    itemsize = jnp.dtype(x.dtype).itemsize
    rows, cols, block_rows, needs_pad = _choose_layout(n, itemsize)
    padded = rows * cols

    xf = x.reshape(-1)
    if needs_pad:
        xf = jnp.pad(xf, (0, padded - n))       # swish(0) == 0; sliced off below
    x2 = xf.reshape(rows, cols)

    out = pl.pallas_call(
        _swish_kernel,
        out_shape=jax.ShapeDtypeStruct((rows, cols), x.dtype),
        grid_spec=pltpu.PrefetchScalarGridSpec(
            num_scalar_prefetch=1,              # beta -> SMEM scalar
            grid=(rows // block_rows,),
            in_specs=[pl.BlockSpec((block_rows, cols), lambda i, b: (i, 0))],
            out_specs=pl.BlockSpec((block_rows, cols), lambda i, b: (i, 0)),
        ),
        compiler_params=pltpu.CompilerParams(
            dimension_semantics=("parallel",)),
        cost_estimate=pl.CostEstimate(
            flops=2 * padded,                   # beta*x and x*sigmoid
            transcendentals=padded,             # one sigmoid per element
            bytes_accessed=2 * padded * itemsize),
    )(beta, x2)

    if needs_pad:
        out = out.reshape(-1)[:n]
    return out.reshape(orig_shape)


def swish_ref(x, beta):
    """Pure-JAX reference identical to the PyTorch forward."""
    return x * jax.nn.sigmoid(beta * x)


if __name__ == "__main__":
    key = jax.random.PRNGKey(0)
    B, C, H, W = 2, 4, 16, 16
    kx, ky = jax.random.split(key)

    x = jax.random.normal(kx, (B, C, H, W), dtype=jnp.float32)
    beta = jnp.ones((1,), dtype=jnp.float32)    # nn.Parameter(torch.ones(1)) init

    out = jax.block_until_ready(swish(x, beta)) # aligned (no-pad) path
    ref = swish_ref(x, beta)
    assert out.shape == x.shape
    assert jnp.allclose(out, ref, atol=1e-6, rtol=1e-6), "mismatch vs reference"

    # Ragged-size input to exercise the padding / slicing path.
    x_odd = jax.random.normal(ky, (3, 37), dtype=jnp.float32)
    out_odd = jax.block_until_ready(swish(x_odd, beta))
    assert jnp.allclose(out_odd, swish_ref(x_odd, beta), atol=1e-6, rtol=1e-6)

    print("KERNEL_OK")
</pallas_src>

<mosaic_0001>
module attributes {stable_mosaic.version = 11 : i64} {
  func.func @_swish_kernel(%arg0: i32, %arg1: memref<1xf32, #tpu.memory_space<smem>>, %arg2: memref<8x128xf32, #tpu.memory_space<vmem>>, %arg3: memref<8x128xf32, #tpu.memory_space<vmem>>) attributes {dimension_semantics = [#tpu.dimension_semantics<parallel>], iteration_bounds = array<i64: 2>, scalar_prefetch = 1 : i64, scratch_operands = 0 : i64, tpu.core_type = #tpu.core_type<tc>, window_params = [{transform_indices = @transform_0, window_bounds = array<i64: 8, 128>}, {transform_indices = @transform_1, window_bounds = array<i64: 8, 128>}]} {
    %c0 = arith.constant 0 : index
    %c0_0 = arith.constant 0 : index
    %0 = vector.load %arg2[%c0, %c0_0] : memref<8x128xf32, #tpu.memory_space<vmem>>, vector<8x128xf32>
    %c0_1 = arith.constant 0 : index
    %1 = memref.load %arg1[%c0_1] : memref<1xf32, #tpu.memory_space<smem>>
    %2 = vector.broadcast %1 : f32 to vector<8x128xf32>
    %3 = arith.mulf %2, %0 : vector<8x128xf32>
    %4 = arith.negf %3 : vector<8x128xf32>
    %5 = math.exp %4 : vector<8x128xf32>
    %cst = arith.constant 1.000000e+00 : f32
    %6 = vector.broadcast %cst : f32 to vector<8x128xf32>
    %7 = arith.addf %6, %5 : vector<8x128xf32>
    %8 = arith.divf %6, %7 : vector<8x128xf32>
    %9 = arith.mulf %0, %8 : vector<8x128xf32>
    %c0_2 = arith.constant 0 : index
    %c0_3 = arith.constant 0 : index
    %10 = vector.load %arg3[%c0_2, %c0_3] : memref<8x128xf32, #tpu.memory_space<vmem>>, vector<8x128xf32>
    tpu.vector_store %arg3[%c0_2, %c0_3], %9 {strides = array<i32>} : memref<8x128xf32, #tpu.memory_space<vmem>>, vector<8x128xf32>,
    return
  }
  func.func @transform_0(%arg0: i32, %arg1: memref<1xf32, #tpu.memory_space<smem>>) -> (i32, i32) {
    %c0_i32 = arith.constant 0 : i32
    %c0_i32_0 = arith.constant 0 : i32
    return %arg0, %c0_i32 : i32, i32
  }
  func.func @transform_1(%arg0: i32, %arg1: memref<1xf32, #tpu.memory_space<smem>>) -> (i32, i32) {
    %c0_i32 = arith.constant 0 : i32
    %c0_i32_0 = arith.constant 0 : i32
    return %arg0, %c0_i32 : i32, i32
  }
}

</mosaic_0001>

<llo_original>
// kernel: tpu_custom_call.1
$region0: #{tpu_custom_call.1}
  #allocation0 [shape = 'u32[]', space=smem, size = 0x4, offset = 0x4, fixed_abs, tag = 'smem constant byte address 0x4 - core index']
  #allocation1 [shape = 'u32[144,128]{1,0:T(1,128)}', space=vmem, size = 0x12000, scoped, tag = 'internal scratch']
  #allocation2 [shape = 's32[1]{0}', space=sflag, size = 0x4, scoped, tag = 'scoped memory for tpu_custom_call.1']
  #allocation3 [shape = 'f32[1]{0:T(128)S(6)}', space=smem, size = 0x200, scoped, tag = 'prefetched SMEM operand 0']
  %s0 = inlined_call_operand.<no memory space> [shape: f32[1], index: 0, kind: input, shape index: {}]
  %s1 = inlined_call_operand.hbm [shape: f32[16,128], index: 1, kind: input, shape index: {}]
  %s2 = inlined_call_operand.hbm [shape: f32[16,128], index: 2, kind: output, shape index: {}]
  %s3 = sld [smem:[#allocation0]]
  $region41: #{tpu_custom_call.1} parent=0
    _
  %s5 = ssub.s32 1, %s3
  %s6 = scalar_select 0, %s5, %s3
  %7 = sst [smem:[#allocation3]] %s0
  $region1: #{tpu_custom_call.1} parent=0
    #allocation4 [shape = 'u8[8192]{0}', space=vmem, size = 0x2000, scoped, tag = 'input window, operand 1']
    #allocation5 [shape = 's32[2]{0}', space=sflag, size = 0x8, scoped, tag = 'scoped memory for tpu_custom_call.1']
    #allocation6 [shape = 's32[2]{0}', space=sflag, size = 0x8, scoped, tag = 'scoped memory for tpu_custom_call.1']
    #allocation7 [shape = 'u8[8192]{0}', space=vmem, size = 0x2000, scoped, tag = 'output window, operand 0']
    %8 = vsyncpa [#allocation5], 0
    %s9 = scalar_lea.sflag [#allocation5], 1
    %10 = vsyncpa %s9, 0
    %11 = vsyncpa [#allocation6], 0
    %s12 = scalar_lea.sflag [#allocation6], 1
    %13 = vsyncpa %s12, 0
    loop: start=0, step=1, limit=4
    $region2: #{tpu_custom_call.1} parent=1 // loop_pre_header
      _
    $region3: #{tpu_custom_call.1} parent=1 // loop_header
      %s15 = sphi 0, %s19
      %p16 = scmp.ge.s32.totalorder %s15, 4
      %s25 = sphi 0, %s27
      %s28 = sphi 0, %s25
      %s29 = sphi 0, %s28
      %s45 = sphi 0, %s29
      %s51 = sphi 0, %s53
      %s54 = sphi 0, %s51
      %s55 = sphi 0, %s54
      %s71 = sphi 0, %s55
    $region4: #{tpu_custom_call.1} parent=1 // loop_header_branch
      %18 = sbr.rel (%p16) target = $region8
    $region5: #{tpu_custom_call.1} parent=1 // loop_body
      %s20 = ssub.s32 %s15, 1
      %s21 = ssub.s32 %s15, 2
      %s22 = sadd.s32 %s15, 1
      %s23 = ssub.s32 %s15, %s22
      %p24 = scmp.eq.s32.totalorder %s23, 0
      %s26 = sadd.s32 %s25, 1
      %s27 = scalar_select %p24, %s25, %s26
      %p30 = pneg %p24
      %p31 = scmp.eq.s32.totalorder %s15, 1
      %p32 = por %p30, %p31
      %p33 = scmp.ne.s32.totalorder %s25, %s28
      %p34 = scmp.eq.s32.totalorder %s15, 0
      %p35 = por %p33, %p34
      %p36 = scmp.ne.s32.totalorder %s25, %s28
      %p37 = scmp.eq.s32.totalorder %s20, 1
      %p38 = por %p36, %p37
      %p39 = scmp.ne.s32.totalorder %s28, %s29
      %p40 = scmp.eq.s32.totalorder %s20, 0
      %p41 = por %p39, %p40
      %p42 = scmp.ne.s32.totalorder %s28, %s29
      %p43 = scmp.eq.s32.totalorder %s21, 1
      %p44 = por %p42, %p43
      %p46 = scmp.ne.s32.totalorder %s29, %s45
      %p47 = scmp.eq.s32.totalorder %s21, 0
      %p48 = por %p46, %p47
      %s49 = ssub.s32 %s15, %s22
      %p50 = scmp.eq.s32.totalorder %s49, 0
      %s52 = sadd.s32 %s51, 1
      %s53 = scalar_select %p50, %s51, %s52
      %p56 = pneg %p50
      %p57 = scmp.eq.s32.totalorder %s15, 1
      %p58 = por %p56, %p57
      %p59 = scmp.ne.s32.totalorder %s51, %s54
      %p60 = scmp.eq.s32.totalorder %s15, 0
      %p61 = por %p59, %p60
      %p62 = scmp.ne.s32.totalorder %s51, %s54
      %p63 = scmp.eq.s32.totalorder %s20, 1
      %p64 = por %p62, %p63
      %p65 = scmp.ne.s32.totalorder %s54, %s55
      %p66 = scmp.eq.s32.totalorder %s20, 0
      %p67 = por %p65, %p66
      %p68 = scmp.ne.s32.totalorder %s54, %s55
      %p69 = scmp.eq.s32.totalorder %s21, 1
      %p70 = por %p68, %p69
      %p72 = scmp.ne.s32.totalorder %s55, %s71
      %p73 = scmp.eq.s32.totalorder %s21, 0
      %p74 = por %p72, %p73
      %p75 = scmp.le.s32.totalorder 1, %s15
      %p76 = scmp.lt.s32.totalorder %s15, 3
      %p77 = pnand %p75, %p76
      %p78 = pneg %p77
      // Predicated region
      $region9: #{tpu_custom_call.1} parent=5 // pred_check
        _
      $region10: #{tpu_custom_call.1} parent=5 // pred_check_branch
        %80 = sbr.rel (%p77) target = $region12
      $region11: #{tpu_custom_call.1} parent=5 // pred_region
        %s81 = ssub.s32 %s15, 1
      $region12: #{tpu_custom_call.1} parent=5 // pred_fallthru
        _
      %p82 = scmp.lt.s32.totalorder %s15, 2
      // Predicated region
      $region13: #{tpu_custom_call.1} parent=5 // pred_check
        %p83 = pneg %p82
      $region14: #{tpu_custom_call.1} parent=5 // pred_check_branch
        %85 = sbr.rel (%p83) target = $region16
      $region15: #{tpu_custom_call.1} parent=5 // pred_region
        // Predicated region
        $region17: #{tpu_custom_call.1} parent=15 // pred_check
          %p86 = pneg %p35
        $region18: #{tpu_custom_call.1} parent=15 // pred_check_branch
          %88 = sbr.rel (%p86) target = $region20
        $region19: #{tpu_custom_call.1} parent=15 // pred_region
          %s89 = sand.u32 %s25, 1
          %s90 = scalar_lea.sflag [#allocation5], %s89
          %s91 = sand.u32 %s25, 1
          %s92 = smul.addr %s91, 8
          %s93 = scalar_lea.vmem [#allocation4], %s92
          %s95 = ssub.s32 128, 128
          %96 = vsyncadd %s90, %s95
          %s97 = smul.addr %s15, 128
          %s98 = scalar_lea.hbm %s1, %s97
          %s100 = sshll.u32 %s93, 4
          %s101 = int_to_ptr.vmem [resolvable:$true] %s100
          %103 = dma.hbm_to_vmem [thread:$0]  %s98, 128, %s101, %s90
        $region20: #{tpu_custom_call.1} parent=15 // pred_fallthru
          _
      $region16: #{tpu_custom_call.1} parent=5 // pred_fallthru
        _
      %p104 = scmp.le.s32.totalorder 1, %s15
      %p105 = scmp.lt.s32.totalorder %s15, 3
      %p106 = pnand %p104, %p105
      %p107 = pneg %p106
      // Predicated region
      $region21: #{tpu_custom_call.1} parent=5 // pred_check
        _
      $region22: #{tpu_custom_call.1} parent=5 // pred_check_branch
        %109 = sbr.rel (%p106) target = $region24
      $region23: #{tpu_custom_call.1} parent=5 // pred_region
        %s110 = ssub.s32 %s15, 1
        %s111 = sand.u32 %s28, 1
        %s112 = scalar_lea.sflag [#allocation5], %s111
        %s113 = sand.u32 %s28, 1
        %s114 = smul.addr %s113, 8
        %s115 = scalar_lea.vmem [#allocation4], %s114
        // Predicated region
        $region25: #{tpu_custom_call.1} parent=23 // pred_check
          %p116 = pneg %p41
        $region26: #{tpu_custom_call.1} parent=23 // pred_check_branch
          %118 = sbr.rel (%p116) target = $region28
        $region27: #{tpu_custom_call.1} parent=23 // pred_region
          %119 = dma.done %s112, 128
        $region28: #{tpu_custom_call.1} parent=23 // pred_fallthru
          _
        %s120 = sand.u32 %s28, 1
        %s121 = scalar_lea.sflag [#allocation5], %s120
        %s122 = sand.u32 %s28, 1
        %s123 = smul.addr %s122, 8
        %s124 = scalar_lea.vmem [#allocation4], %s123
        %p125 = pneg %p41
        %p126 = pneg %p38
        %p127 = pneg %p67
        %p128 = pneg %p64
        %s129 = sand.u32 %s54, 1
        %s130 = scalar_lea.sflag [#allocation6], %s129
        %s131 = sand.u32 %s54, 1
        %s132 = smul.addr %s131, 8
        %s133 = scalar_lea.vmem [#allocation7], %s132
        %v134 = vld [vmem:[%s115] sm:$0xff]
        %s135 = sld [smem:[#allocation3]]
        %v136 = vstv %s135
        %v137 = vmul.f32 %v136, %v134
        %v138 = vxor.u32 %v137, 2147483648
        %v139 = vmul.f32 %v138, 1.442695
        %v140 = vpow.pop %v139
        %v141 = vadd.f32 %v140, 1.0
        %v142 = vrcp.pop %v141
        %v143 = vmul.f32 1.0, %v142
        %v144 = vmul.f32 %v134, %v143
        %145 = vst [vmem:[%s133] sm:$0xff] %v144
        %s146 = sand.u32 %s54, 1
        %s147 = scalar_lea.sflag [#allocation6], %s146
        %s148 = sand.u32 %s54, 1
        %s149 = smul.addr %s148, 8
        %s150 = scalar_lea.vmem [#allocation7], %s149
        // Predicated region
        $region29: #{tpu_custom_call.1} parent=23 // pred_check
          %p151 = pneg %p64
        $region30: #{tpu_custom_call.1} parent=23 // pred_check_branch
          %153 = sbr.rel (%p151) target = $region32
        $region31: #{tpu_custom_call.1} parent=23 // pred_region
          %s155 = ssub.s32 128, 128
          %156 = vsyncadd %s147, %s155
          %s157 = smul.addr %s20, 128
          %s158 = scalar_lea.hbm %s2, %s157
          %s160 = sshll.u32 %s150, 4
          %s161 = int_to_ptr.vmem [resolvable:$true] %s160
          %163 = dma.vmem_to_hbm [thread:$0]  %s161, 128, %s158, %s147
        $region32: #{tpu_custom_call.1} parent=23 // pred_fallthru
          _
      $region24: #{tpu_custom_call.1} parent=5 // pred_fallthru
        _
      %p164 = scmp.le.s32.totalorder 2, %s15
      // Predicated region
      $region33: #{tpu_custom_call.1} parent=5 // pred_check
        %p165 = pneg %p164
      $region34: #{tpu_custom_call.1} parent=5 // pred_check_branch
        %167 = sbr.rel (%p165) target = $region36
      $region35: #{tpu_custom_call.1} parent=5 // pred_region
        %s168 = ssub.s32 %s15, 2
        // Predicated region
        $region37: #{tpu_custom_call.1} parent=35 // pred_check
          %p169 = pneg %p70
        $region38: #{tpu_custom_call.1} parent=35 // pred_check_branch
          %171 = sbr.rel (%p169) target = $region40
        $region39: #{tpu_custom_call.1} parent=35 // pred_region
          %s172 = sand.u32 %s55, 1
          %s173 = scalar_lea.sflag [#allocation6], %s172
          %s174 = sand.u32 %s55, 1
          %s175 = smul.addr %s174, 8
          %s176 = scalar_lea.vmem [#allocation7], %s175
          %177 = dma.done %s173, 128
        $region40: #{tpu_custom_call.1} parent=35 // pred_fallthru
          _
      $region36: #{tpu_custom_call.1} parent=5 // pred_fallthru
        _
    $region6: #{tpu_custom_call.1} parent=1 // loop_footer
      %s19 = sadd.s32 1, %s15
    $region7: #{tpu_custom_call.1} parent=1 // loop_footer_branch
      %14 = sbr.rel target = $region3
    $region8: #{tpu_custom_call.1} parent=1 // loop_exit
      _
    %178 = vsyncpa [#allocation5], 1
    %s179 = scalar_lea.sflag [#allocation5], 1
    %180 = vsyncpa %s179, 1
    %181 = vsyncpa [#allocation6], 1
    %s182 = scalar_lea.sflag [#allocation6], 1
    %183 = vsyncpa %s182, 1

</llo_original>
